<compile_context>
chip_gen: v7x
topology: tpu7x:2x2x1
jax: 0.10.0
libtpu: 0.0.40
codegen_flags: <defaults>
</compile_context>

<pallas_src>
import functools

import jax
import jax.numpy as jnp
from jax.experimental import pallas as pl
from jax.experimental.pallas import tpu as pltpu

EPS = 1e-5  # nn.LayerNorm default eps


def _round_up(x, m):
    return (x + m - 1) // m * m


def _layer_norm(h, gamma, beta):
    # One-pass statistics: mean and mean-of-squares issued together so the two
    # cross-lane reductions can overlap on the XLU units.
    mu = jnp.mean(h, axis=-1, keepdims=True)
    ms = jnp.mean(h * h, axis=-1, keepdims=True)
    var = jnp.maximum(ms - mu * mu, 0.0)
    return (h - mu) * jax.lax.rsqrt(var + EPS) * gamma + beta


def residual_block_kernel(x_ref, w1_ref, w2_ref, p_ref, o_ref):
    # Packed params: rows 0..5 = b1, g1, be1, b2, g2, be2 (each (1, F), f32).
    b1, g1, be1 = p_ref[0:1, :], p_ref[1:2, :], p_ref[2:3, :]
    b2, g2, be2 = p_ref[3:4, :], p_ref[4:5, :], p_ref[5:6, :]

    # fc1 -> LayerNorm -> ReLU  (bf16 MXU operands, f32 accumulation)
    x_bf = x_ref[...].astype(jnp.bfloat16)
    h = jnp.dot(x_bf, w1_ref[...], preferred_element_type=jnp.float32) + b1
    h = _layer_norm(h, g1, be1)
    h = jnp.maximum(h, 0.0)

    # fc2 -> LayerNorm
    h = jnp.dot(h.astype(jnp.bfloat16), w2_ref[...],
                preferred_element_type=jnp.float32) + b2
    h = _layer_norm(h, g2, be2)

    # Residual add: re-read x from VMEM (short live range) + final ReLU.
    o_ref[...] = jnp.maximum(h + x_ref[...], 0.0)


def _const_block_spec(shape):
    """BlockSpec for a grid-invariant operand (index_map always (0, 0)).

    Requests a single VMEM buffer (default pipelining double-buffers) so the
    weight / param blocks only occupy one copy of VMEM; falls back to the
    default spec on jax versions without pipeline_mode.
    """
    index_map = lambda i: (0, 0)
    if hasattr(pl, "Buffered"):
        try:
            return pl.BlockSpec(shape, index_map, pipeline_mode=pl.Buffered(1))
        except TypeError:
            pass
    return pl.BlockSpec(shape, index_map)


def prepare_residual_block_params(w1, b1, g1, be1, w2, b2, g2, be2):
    """One-time parameter prep (call OUTSIDE the per-step jit and reuse).

    Returns (w1_bf16, w2_bf16, packed) where packed is a sublane-aligned
    (8, F) f32 block holding b1, g1, be1, b2, g2, be2 -> one aligned DMA
    instead of six 1-row copies, and the f32->bf16 weight convert is not
    re-done (and re-paid in HBM traffic) on every forward call.
    """
    F = w1.shape[0]
    packed = jnp.concatenate(
        [b1, g1, be1, b2, g2, be2, jnp.zeros((2, F), jnp.float32)], axis=0)
    return w1.astype(jnp.bfloat16), w2.astype(jnp.bfloat16), packed


@functools.partial(jax.jit, static_argnames=("block_rows",))
def residual_block(x, w1_bf16, w2_bf16, packed_params, *, block_rows=None):
    """Fused ResidualBlock forward.

    x: (B, F) f32.  w*_bf16: (F_in, F_out) bf16 = transpose of nn.Linear.weight.
    packed_params: (8, F) f32 block from prepare_residual_block_params().
    """
    B, F = x.shape

    # Row tile: as large as the activation-VMEM budget allows (x + out f32
    # tiles, double-buffered => 16*F bytes per row), capped at 2048 rows and
    # clamped to the sublane-aligned batch for small inputs.
    if block_rows is None:
        tb = max(256, min(2048, (32 * 1024 * 1024) // (16 * F)))
    else:
        tb = block_rows
    tb = min(_round_up(tb, 8), _round_up(B, 8))
    grid = pl.cdiv(B, tb)  # ragged tail handled by Pallas boundary masking

    row_spec = pl.BlockSpec((tb, F), lambda i: (i, 0))
    w_spec = _const_block_spec((F, F))   # constant across grid, single-buffered
    p_spec = _const_block_spec((8, F))   # constant across grid, single-buffered

    # VMEM budget derived from the actual buffers (+ headroom for compiler
    # scratch), instead of a hard-coded 32 MiB.
    act_bytes = 2 * 2 * tb * F * 4        # x & out tiles, double-buffered, f32
    wgt_bytes = 2 * F * F * 2             # two bf16 weight blocks (1 buffer)
    par_bytes = 8 * F * 4                 # packed param block
    vmem_limit = int(min(max(act_bytes + wgt_bytes + par_bytes + (8 << 20),
                             32 << 20), 100 << 20))

    cost = pl.CostEstimate(
        flops=2 * 2 * B * F * F,           # two (B,F)x(F,F) matmuls
        transcendentals=2 * B,             # one rsqrt per row per LayerNorm
        bytes_accessed=(2 * B * F * 4      # x in + out (f32)
                        + 2 * F * F * 2    # bf16 weights
                        + 8 * F * 4),      # packed params
    )

    return pl.pallas_call(
        residual_block_kernel,
        out_shape=jax.ShapeDtypeStruct((B, F), x.dtype),
        grid_spec=pltpu.PrefetchScalarGridSpec(
            num_scalar_prefetch=0,
            grid=(grid,),
            in_specs=[row_spec, w_spec, w_spec, p_spec],
            out_specs=row_spec,
        ),
        compiler_params=pltpu.CompilerParams(
            # Row axis is embarrassingly parallel.
            # TODO(synk): on v7x verify this shards across both TensorCores;
            # switch to pltpu.CORE_PARALLEL for this axis if it does not.
            dimension_semantics=("parallel",),
            vmem_limit_bytes=vmem_limit,
        ),
        cost_estimate=cost,
    )(x, w1_bf16, w2_bf16, packed_params)


# ---------------------------------------------------------------------------
# References for correctness checking.
# ---------------------------------------------------------------------------
def _layer_norm_two_pass(h, gamma, beta):
    mu = jnp.mean(h, axis=-1, keepdims=True)
    var = jnp.mean(jnp.square(h - mu), axis=-1, keepdims=True)
    return (h - mu) * jax.lax.rsqrt(var + EPS) * gamma + beta


def reference_f32(x, w1, b1, g1, be1, w2, b2, g2, be2):
    h = x @ w1 + b1
    h = _layer_norm_two_pass(h, g1, be1)
    h = jnp.maximum(h, 0.0)
    h = h @ w2 + b2
    h = _layer_norm_two_pass(h, g2, be2)
    return jnp.maximum(h + x, 0.0)


def reference_bf16(x, w1, b1, g1, be1, w2, b2, g2, be2):
    # Same numerics as the kernel: bf16 matmul operands, f32 everything else.
    h = jnp.dot(x.astype(jnp.bfloat16), w1.astype(jnp.bfloat16),
                preferred_element_type=jnp.float32) + b1
    h = _layer_norm(h, g1, be1)
    h = jnp.maximum(h, 0.0)
    h = jnp.dot(h.astype(jnp.bfloat16), w2.astype(jnp.bfloat16),
                preferred_element_type=jnp.float32) + b2
    h = _layer_norm(h, g2, be2)
    return jnp.maximum(h + x, 0.0)


if __name__ == "__main__":
    F = 128  # in_features (lane-aligned)

    key = jax.random.PRNGKey(0)
    kx, kw1, kb1, kw2, kb2, kg1, kbe1, kg2, kbe2, kx2 = jax.random.split(key, 10)

    # Deterministic synthetic parameters (kaiming-uniform-ish scale for Linear).
    scale = 1.0 / jnp.sqrt(jnp.float32(F))
    w1 = jax.random.uniform(kw1, (F, F), jnp.float32, -scale, scale)
    b1 = jax.random.uniform(kb1, (1, F), jnp.float32, -scale, scale)
    w2 = jax.random.uniform(kw2, (F, F), jnp.float32, -scale, scale)
    b2 = jax.random.uniform(kb2, (1, F), jnp.float32, -scale, scale)
    # LayerNorm affine params (perturbed from PyTorch's ones/zeros default so
    # the affine path is actually exercised; deterministic).
    g1 = 1.0 + 0.1 * jax.random.normal(kg1, (1, F), jnp.float32)
    be1 = 0.1 * jax.random.normal(kbe1, (1, F), jnp.float32)
    g2 = 1.0 + 0.1 * jax.random.normal(kg2, (1, F), jnp.float32)
    be2 = 0.1 * jax.random.normal(kbe2, (1, F), jnp.float32)
    raw = (w1, b1, g1, be1, w2, b2, g2, be2)

    # One-time parameter prep (bf16 weights + packed (8, F) vector block),
    # amortized across all forward calls.
    prep = prepare_residual_block_params(*raw)

    # Case 1: sublane-aligned batch, single large row tile (auto block_rows).
    x = jax.random.normal(kx, (48, F), dtype=jnp.float32)
    out = jax.block_until_ready(residual_block(x, *prep))
    assert out.shape == x.shape and out.dtype == x.dtype
    assert jnp.allclose(out, reference_bf16(x, *raw), atol=5e-3, rtol=5e-3)
    assert jnp.allclose(out, reference_f32(x, *raw), atol=5e-2, rtol=5e-2)

    # Case 2: ragged batch (no pad/slice round trip), multi-step grid with a
    # partial boundary block.
    x2 = jax.random.normal(kx2, (50, F), dtype=jnp.float32)
    out2 = jax.block_until_ready(residual_block(x2, *prep, block_rows=16))
    assert out2.shape == x2.shape
    assert jnp.allclose(out2, reference_bf16(x2, *raw), atol=5e-3, rtol=5e-3)
    assert jnp.allclose(out2, reference_f32(x2, *raw), atol=5e-2, rtol=5e-2)

    print("KERNEL_OK")
</pallas_src>

<mosaic_0001>
module attributes {stable_mosaic.version = 11 : i64} {
  func.func @residual_block_kernel(%arg0: i32, %arg1: memref<48x128xf32, #tpu.memory_space<vmem>>, %arg2: memref<128x128xbf16, #tpu.memory_space<vmem>>, %arg3: memref<128x128xbf16, #tpu.memory_space<vmem>>, %arg4: memref<8x128xf32, #tpu.memory_space<vmem>>, %arg5: memref<48x128xf32, #tpu.memory_space<vmem>>) attributes {dimension_semantics = [#tpu.dimension_semantics<parallel>], iteration_bounds = array<i64: 1>, scalar_prefetch = 0 : i64, scratch_operands = 0 : i64, tpu.core_type = #tpu.core_type<tc>, window_params = [{transform_indices = @transform_0, window_bounds = array<i64: 48, 128>}, {pipeline_mode = #tpu.pipeline_mode<synchronous>, transform_indices = @transform_1, window_bounds = array<i64: 128, 128>}, {pipeline_mode = #tpu.pipeline_mode<synchronous>, transform_indices = @transform_2, window_bounds = array<i64: 128, 128>}, {pipeline_mode = #tpu.pipeline_mode<synchronous>, transform_indices = @transform_3, window_bounds = array<i64: 8, 128>}, {transform_indices = @transform_4, window_bounds = array<i64: 48, 128>}]} {
    %c0 = arith.constant 0 : index
    %c0_0 = arith.constant 0 : index
    %0 = vector.load %arg4[%c0, %c0_0] : memref<8x128xf32, #tpu.memory_space<vmem>>, vector<1x128xf32>
    %c1 = arith.constant 1 : index
    %c0_1 = arith.constant 0 : index
    %1 = vector.load %arg4[%c1, %c0_1] : memref<8x128xf32, #tpu.memory_space<vmem>>, vector<1x128xf32>
    %c2 = arith.constant 2 : index
    %c0_2 = arith.constant 0 : index
    %2 = vector.load %arg4[%c2, %c0_2] : memref<8x128xf32, #tpu.memory_space<vmem>>, vector<1x128xf32>
    %c3 = arith.constant 3 : index
    %c0_3 = arith.constant 0 : index
    %3 = vector.load %arg4[%c3, %c0_3] : memref<8x128xf32, #tpu.memory_space<vmem>>, vector<1x128xf32>
    %c4 = arith.constant 4 : index
    %c0_4 = arith.constant 0 : index
    %4 = vector.load %arg4[%c4, %c0_4] : memref<8x128xf32, #tpu.memory_space<vmem>>, vector<1x128xf32>
    %c5 = arith.constant 5 : index
    %c0_5 = arith.constant 0 : index
    %5 = vector.load %arg4[%c5, %c0_5] : memref<8x128xf32, #tpu.memory_space<vmem>>, vector<1x128xf32>
    %c0_6 = arith.constant 0 : index
    %c0_7 = arith.constant 0 : index
    %6 = vector.load %arg1[%c0_6, %c0_7] : memref<48x128xf32, #tpu.memory_space<vmem>>, vector<48x128xf32>
    %7 = arith.truncf %6 : vector<48x128xf32> to vector<48x128xbf16>
    %c0_8 = arith.constant 0 : index
    %c0_9 = arith.constant 0 : index
    %8 = vector.load %arg2[%c0_8, %c0_9] : memref<128x128xbf16, #tpu.memory_space<vmem>>, vector<128x128xbf16>
    %cst = arith.constant dense<0.000000e+00> : vector<48x128xf32>
    %9 = tpu.matmul %7, %8, %cst {dimension_numbers = #tpu.dot_dimension_numbers<[1], [0], [0], [1], [0, 0, 1, 1], [], []>} : vector<48x128xbf16>, vector<128x128xbf16>, vector<48x128xf32> -> vector<48x128xf32>
    %10 = vector.broadcast %0 : vector<1x128xf32> to vector<48x128xf32>
    %11 = arith.addf %9, %10 : vector<48x128xf32>
    %cst_10 = arith.constant dense<0.000000e+00> : vector<48xf32>
    %12 = vector.multi_reduction <add>, %11, %cst_10 [1] : vector<48x128xf32> to vector<48xf32>
    %13 = vector.shape_cast %12 : vector<48xf32> to vector<48x1xf32>
    %cst_11 = arith.constant 1.280000e+02 : f32
    %14 = vector.broadcast %cst_11 : f32 to vector<48x1xf32>
    %15 = arith.divf %13, %14 : vector<48x1xf32>
    %16 = arith.mulf %11, %11 : vector<48x128xf32>
    %cst_12 = arith.constant dense<0.000000e+00> : vector<48xf32>
    %17 = vector.multi_reduction <add>, %16, %cst_12 [1] : vector<48x128xf32> to vector<48xf32>
    %18 = vector.shape_cast %17 : vector<48xf32> to vector<48x1xf32>
    %cst_13 = arith.constant 1.280000e+02 : f32
    %19 = vector.broadcast %cst_13 : f32 to vector<48x1xf32>
    %20 = arith.divf %18, %19 : vector<48x1xf32>
    %21 = arith.mulf %15, %15 : vector<48x1xf32>
    %22 = arith.subf %20, %21 : vector<48x1xf32>
    %cst_14 = arith.constant 0.000000e+00 : f32
    %23 = vector.broadcast %cst_14 : f32 to vector<48x1xf32>
    %24 = arith.maximumf %22, %23 : vector<48x1xf32>
    %25 = vector.broadcast %15 : vector<48x1xf32> to vector<48x128xf32>
    %26 = arith.subf %11, %25 : vector<48x128xf32>
    %cst_15 = arith.constant 9.99999974E-6 : f32
    %27 = vector.broadcast %cst_15 : f32 to vector<48x1xf32>
    %28 = arith.addf %24, %27 : vector<48x1xf32>
    %29 = math.rsqrt %28 : vector<48x1xf32>
    %30 = vector.broadcast %29 : vector<48x1xf32> to vector<48x128xf32>
    %31 = arith.mulf %26, %30 : vector<48x128xf32>
    %32 = vector.broadcast %1 : vector<1x128xf32> to vector<48x128xf32>
    %33 = arith.mulf %31, %32 : vector<48x128xf32>
    %34 = vector.broadcast %2 : vector<1x128xf32> to vector<48x128xf32>
    %35 = arith.addf %33, %34 : vector<48x128xf32>
    %cst_16 = arith.constant 0.000000e+00 : f32
    %36 = vector.broadcast %cst_16 : f32 to vector<48x128xf32>
    %37 = arith.maximumf %35, %36 : vector<48x128xf32>
    %38 = arith.truncf %37 : vector<48x128xf32> to vector<48x128xbf16>
    %c0_17 = arith.constant 0 : index
    %c0_18 = arith.constant 0 : index
    %39 = vector.load %arg3[%c0_17, %c0_18] : memref<128x128xbf16, #tpu.memory_space<vmem>>, vector<128x128xbf16>
    %cst_19 = arith.constant dense<0.000000e+00> : vector<48x128xf32>
    %40 = tpu.matmul %38, %39, %cst_19 {dimension_numbers = #tpu.dot_dimension_numbers<[1], [0], [0], [1], [0, 0, 1, 1], [], []>} : vector<48x128xbf16>, vector<128x128xbf16>, vector<48x128xf32> -> vector<48x128xf32>
    %41 = vector.broadcast %3 : vector<1x128xf32> to vector<48x128xf32>
    %42 = arith.addf %40, %41 : vector<48x128xf32>
    %cst_20 = arith.constant dense<0.000000e+00> : vector<48xf32>
    %43 = vector.multi_reduction <add>, %42, %cst_20 [1] : vector<48x128xf32> to vector<48xf32>
    %44 = vector.shape_cast %43 : vector<48xf32> to vector<48x1xf32>
    %cst_21 = arith.constant 1.280000e+02 : f32
    %45 = vector.broadcast %cst_21 : f32 to vector<48x1xf32>
    %46 = arith.divf %44, %45 : vector<48x1xf32>
    %47 = arith.mulf %42, %42 : vector<48x128xf32>
    %cst_22 = arith.constant dense<0.000000e+00> : vector<48xf32>
    %48 = vector.multi_reduction <add>, %47, %cst_22 [1] : vector<48x128xf32> to vector<48xf32>
    %49 = vector.shape_cast %48 : vector<48xf32> to vector<48x1xf32>
    %cst_23 = arith.constant 1.280000e+02 : f32
    %50 = vector.broadcast %cst_23 : f32 to vector<48x1xf32>
    %51 = arith.divf %49, %50 : vector<48x1xf32>
    %52 = arith.mulf %46, %46 : vector<48x1xf32>
    %53 = arith.subf %51, %52 : vector<48x1xf32>
    %cst_24 = arith.constant 0.000000e+00 : f32
    %54 = vector.broadcast %cst_24 : f32 to vector<48x1xf32>
    %55 = arith.maximumf %53, %54 : vector<48x1xf32>
    %56 = vector.broadcast %46 : vector<48x1xf32> to vector<48x128xf32>
    %57 = arith.subf %42, %56 : vector<48x128xf32>
    %cst_25 = arith.constant 9.99999974E-6 : f32
    %58 = vector.broadcast %cst_25 : f32 to vector<48x1xf32>
    %59 = arith.addf %55, %58 : vector<48x1xf32>
    %60 = math.rsqrt %59 : vector<48x1xf32>
    %61 = vector.broadcast %60 : vector<48x1xf32> to vector<48x128xf32>
    %62 = arith.mulf %57, %61 : vector<48x128xf32>
    %63 = vector.broadcast %4 : vector<1x128xf32> to vector<48x128xf32>
    %64 = arith.mulf %62, %63 : vector<48x128xf32>
    %65 = vector.broadcast %5 : vector<1x128xf32> to vector<48x128xf32>
    %66 = arith.addf %64, %65 : vector<48x128xf32>
    %c0_26 = arith.constant 0 : index
    %c0_27 = arith.constant 0 : index
    %67 = vector.load %arg1[%c0_26, %c0_27] : memref<48x128xf32, #tpu.memory_space<vmem>>, vector<48x128xf32>
    %68 = arith.addf %66, %67 : vector<48x128xf32>
    %cst_28 = arith.constant 0.000000e+00 : f32
    %69 = vector.broadcast %cst_28 : f32 to vector<48x128xf32>
    %70 = arith.maximumf %68, %69 : vector<48x128xf32>
    %c0_29 = arith.constant 0 : index
    %c0_30 = arith.constant 0 : index
    %71 = vector.load %arg5[%c0_29, %c0_30] : memref<48x128xf32, #tpu.memory_space<vmem>>, vector<48x128xf32>
    tpu.vector_store %arg5[%c0_29, %c0_30], %70 {strides = array<i32>} : memref<48x128xf32, #tpu.memory_space<vmem>>, vector<48x128xf32>,
    return
  }
  func.func @transform_0(%arg0: i32) -> (i32, i32) {
    %c0_i32 = arith.constant 0 : i32
    %c0_i32_0 = arith.constant 0 : i32
    return %arg0, %c0_i32 : i32, i32
  }
  func.func @transform_1(%arg0: i32) -> (i32, i32) {
    %c0_i32 = arith.constant 0 : i32
    %c0_i32_0 = arith.constant 0 : i32
    %c0_i32_1 = arith.constant 0 : i32
    return %c0_i32, %c0_i32_0 : i32, i32
  }
  func.func @transform_2(%arg0: i32) -> (i32, i32) {
    %c0_i32 = arith.constant 0 : i32
    %c0_i32_0 = arith.constant 0 : i32
    %c0_i32_1 = arith.constant 0 : i32
    return %c0_i32, %c0_i32_0 : i32, i32
  }
  func.func @transform_3(%arg0: i32) -> (i32, i32) {
    %c0_i32 = arith.constant 0 : i32
    %c0_i32_0 = arith.constant 0 : i32
    %c0_i32_1 = arith.constant 0 : i32
    return %c0_i32, %c0_i32_0 : i32, i32
  }
  func.func @transform_4(%arg0: i32) -> (i32, i32) {
    %c0_i32 = arith.constant 0 : i32
    %c0_i32_0 = arith.constant 0 : i32
    return %arg0, %c0_i32 : i32, i32
  }
}

</mosaic_0001>

<llo_original>
// kernel: residual_block.1
$region0: #{residual_block.1}
  #allocation0 [shape = 'u32[]', space=smem, size = 0x4, offset = 0x4, fixed_abs, tag = 'smem constant byte address 0x4 - core index']
  #allocation1 [shape = 'u32[144,128]{1,0:T(1,128)}', space=vmem, size = 0x12000, scoped, tag = 'internal scratch']
  %s0 = inlined_call_operand.hbm [shape: f32[48,128], index: 0, kind: input, shape index: {}]
  %s1 = inlined_call_operand.hbm [shape: bf16[128,128], index: 1, kind: input, shape index: {}]
  %s2 = inlined_call_operand.hbm [shape: bf16[128,128], index: 2, kind: input, shape index: {}]
  %s3 = inlined_call_operand.vmem [shape: f32[8,128], index: 3, kind: input, shape index: {}]
  %s4 = inlined_call_operand.hbm [shape: f32[48,128], index: 4, kind: output, shape index: {}]
  %s5 = sld [smem:[#allocation0]]
  $region38: #{residual_block.1} parent=0
    _
  %s7 = ssub.s32 1, %s5
  %s8 = scalar_select 0, %s7, %s5
  $region1: #{residual_block.1} parent=0
    #allocation2 [shape = 'u8[24576]{0}', space=vmem, size = 0x6000, scoped, tag = 'input window, operand 0, single buffered']
    #allocation3 [shape = 's32[1]{0}', space=sflag, size = 0x4, scoped, tag = 'scoped memory for residual_block.1']
    #allocation4 [shape = 's32[1]{0}', space=sflag, size = 0x4, scoped, tag = 'scoped memory for residual_block.1']
    #allocation5 [shape = 'u8[32768]{0}', space=vmem, size = 0x8000, scoped, tag = 'input window, operand 1, single buffered']
    #allocation6 [shape = 's32[1]{0}', space=sflag, size = 0x4, scoped, tag = 'scoped memory for residual_block.1']
    #allocation7 [shape = 'u8[32768]{0}', space=vmem, size = 0x8000, scoped, tag = 'input window, operand 2, single buffered']
    #allocation8 [shape = 'u8[24576]{0}', space=vmem, size = 0x6000, scoped, tag = 'output window, operand 0, single buffered']
    %9 = vsyncpa [#allocation3], 0
    %10 = vsyncpa [#allocation6], 0
    %11 = vsyncpa [#allocation4], 0
    // Predicated region
    $region2: #{residual_block.1} parent=1 // pred_check
      _
    $region3: #{residual_block.1} parent=1 // pred_check_branch
      %13 = sbr.rel (0) target = $region5
    $region4: #{residual_block.1} parent=1 // pred_region
      %s15 = ssub.s32 768, 768
      %16 = vsyncadd [#allocation3], %s15
      %s17 = sshll.u32 [#allocation2], 4
      %s18 = int_to_ptr.vmem [resolvable:$true] %s17
      %23 = dma.hbm_to_vmem [thread:$0]  %s0, 768, %s18, [#allocation3], 128, 128, 8
    $region5: #{residual_block.1} parent=1 // pred_fallthru
      _
    // Predicated region
    $region6: #{residual_block.1} parent=1 // pred_check
      _
    $region7: #{residual_block.1} parent=1 // pred_check_branch
      %25 = sbr.rel (0) target = $region9
    $region8: #{residual_block.1} parent=1 // pred_region
      %s27 = ssub.s32 1024, 1024
      %28 = vsyncadd [#allocation6], %s27
      %s29 = sshll.u32 [#allocation5], 4
      %s30 = int_to_ptr.vmem [resolvable:$true] %s29
      %35 = dma.hbm_to_vmem [thread:$0]  %s1, 1024, %s30, [#allocation6], 64, 64, 4
    $region9: #{residual_block.1} parent=1 // pred_fallthru
      _
    // Predicated region
    $region10: #{residual_block.1} parent=1 // pred_check
      _
    $region11: #{residual_block.1} parent=1 // pred_check_branch
      %37 = sbr.rel (0) target = $region13
    $region12: #{residual_block.1} parent=1 // pred_region
      %s39 = ssub.s32 1024, 1024
      %40 = vsyncadd [#allocation6], %s39
      %s41 = sshll.u32 [#allocation7], 4
      %s42 = int_to_ptr.vmem [resolvable:$true] %s41
      %47 = dma.hbm_to_vmem [thread:$0]  %s2, 1024, %s42, [#allocation6], 64, 64, 4
    $region13: #{residual_block.1} parent=1 // pred_fallthru
      _
    // Predicated region
    $region14: #{residual_block.1} parent=1 // pred_check
      _
    $region15: #{residual_block.1} parent=1 // pred_check_branch
      %49 = sbr.rel (0) target = $region17
    $region16: #{residual_block.1} parent=1 // pred_region
      _
    $region17: #{residual_block.1} parent=1 // pred_fallthru
      _
    // Predicated region
    $region18: #{residual_block.1} parent=1 // pred_check
      _
    $region19: #{residual_block.1} parent=1 // pred_check_branch
      %51 = sbr.rel (0) target = $region21
    $region20: #{residual_block.1} parent=1 // pred_region
      %52 = dma.done [#allocation3], 768
    $region21: #{residual_block.1} parent=1 // pred_fallthru
      _
    // Predicated region
    $region22: #{residual_block.1} parent=1 // pred_check
      _
    $region23: #{residual_block.1} parent=1 // pred_check_branch
      %54 = sbr.rel (0) target = $region25
    $region24: #{residual_block.1} parent=1 // pred_region
      %55 = dma.done [#allocation6], 1024
    $region25: #{residual_block.1} parent=1 // pred_fallthru
      _
    // Predicated region
    $region26: #{residual_block.1} parent=1 // pred_check
      _
    $region27: #{residual_block.1} parent=1 // pred_check_branch
      %57 = sbr.rel (0) target = $region29
    $region28: #{residual_block.1} parent=1 // pred_region
      %58 = dma.done [#allocation6], 1024
    $region29: #{residual_block.1} parent=1 // pred_fallthru
      _
    %v60 = vld [vmem:[%s3] sm:$0x1]
    %v61 = vld [vmem:[%s3 + $0x1] sm:$0x1]
    %v62 = vld [vmem:[%s3 + $0x2] sm:$0x1]
    %v63 = vld [vmem:[%s3 + $0x3] sm:$0x1]
    %v64 = vld [vmem:[%s3 + $0x4] sm:$0x1]
    %v65 = vld [vmem:[%s3 + $0x5] sm:$0x1]
    %v66 = vld [vmem:[#allocation2] sm:$0xff]
    %v67 = vld [vmem:[#allocation2 + $0x8] sm:$0xff]
    %v68 = vld [vmem:[#allocation2 + $0x10] sm:$0xff]
    %v69 = vld [vmem:[#allocation2 + $0x18] sm:$0xff]
    %v70 = vld [vmem:[#allocation2 + $0x20] sm:$0xff]
    %v71 = vld [vmem:[#allocation2 + $0x28] sm:$0xff]
    %v72 = vpack.c.bf16 %v67, %v66
    %v73 = vpack.c.bf16 %v69, %v68
    %v74 = vpack.c.bf16 %v71, %v70
    %v75 = vld [vmem:[#allocation5] sm:$0xf]
    %v76 = vld [vmem:[#allocation5 + $0x4] sm:$0xf]
    %v77 = vld [vmem:[#allocation5 + $0x8] sm:$0xf]
    %v78 = vld [vmem:[#allocation5 + $0xc] sm:$0xf]
    %v79 = vld [vmem:[#allocation5 + $0x10] sm:$0xf]
    %v80 = vld [vmem:[#allocation5 + $0x14] sm:$0xf]
    %v81 = vld [vmem:[#allocation5 + $0x18] sm:$0xf]
    %v82 = vld [vmem:[#allocation5 + $0x1c] sm:$0xf]
    %v83 = vld [vmem:[#allocation5 + $0x20] sm:$0xf]
    %v84 = vld [vmem:[#allocation5 + $0x24] sm:$0xf]
    %v85 = vld [vmem:[#allocation5 + $0x28] sm:$0xf]
    %v86 = vld [vmem:[#allocation5 + $0x2c] sm:$0xf]
    %v87 = vld [vmem:[#allocation5 + $0x30] sm:$0xf]
    %v88 = vld [vmem:[#allocation5 + $0x34] sm:$0xf]
    %v89 = vld [vmem:[#allocation5 + $0x38] sm:$0xf]
    %v90 = vld [vmem:[#allocation5 + $0x3c] sm:$0xf]
    %v91 = vlaneseq
    %v92 = vshrl.u32 %v91, 7
    %v93 = vsub.s32 0, %v92
    %v94 = vrot.slane %v60, %v93
    %v111 = vunpack.c.l.b16 %v75
    %v112 = vunpack.c.l.b16 %v76
    %v113 = vunpack.c.l.b16 %v77
    %v114 = vunpack.c.l.b16 %v78
    %v115 = vunpack.c.l.b16 %v79
    %v116 = vunpack.c.l.b16 %v80
    %v117 = vunpack.c.l.b16 %v81
    %v118 = vunpack.c.l.b16 %v82
    %v119 = vunpack.c.l.b16 %v83
    %v120 = vunpack.c.l.b16 %v84
    %v121 = vunpack.c.l.b16 %v85
    %v122 = vunpack.c.l.b16 %v86
    %v123 = vunpack.c.l.b16 %v87
    %v124 = vunpack.c.l.b16 %v88
    %v125 = vunpack.c.l.b16 %v89
    %v126 = vunpack.c.l.b16 %v90
    %v127 = vpack.c.b16 %v112, %v111
    %v128 = vpack.c.b16 %v114, %v113
    %v129 = vpack.c.b16 %v116, %v115
    %v130 = vpack.c.b16 %v118, %v117
    %v131 = vpack.c.b16 %v120, %v119
    %v132 = vpack.c.b16 %v122, %v121
    %v133 = vpack.c.b16 %v124, %v123
    %v134 = vpack.c.b16 %v126, %v125
    %143 = vmatprep.subr.bf16.mxu0 0
    %144 = vmatpush1.bf16.msra.mxu0 %v127
    %145 = vmatprep.subr.bf16.mxu0 0
    %146 = vmatpush1.bf16.msra.mxu0 %v128
    %147 = vmatprep.subr.bf16.mxu0 0
    %148 = vmatpush1.bf16.msra.mxu0 %v129
    %149 = vmatprep.subr.bf16.mxu0 0
    %150 = vmatpush1.bf16.msra.mxu0 %v130
    %151 = vmatprep.subr.bf16.mxu0 0
    %152 = vmatpush1.bf16.msra.mxu0 %v131
    %153 = vmatprep.subr.bf16.mxu0 0
    %154 = vmatpush1.bf16.msra.mxu0 %v132
    %155 = vmatprep.subr.bf16.mxu0 0
    %156 = vmatpush1.bf16.msra.mxu0 %v133
    %157 = vmatprep.subr.bf16.mxu0 0
    %158 = vmatpush1.bf16.msra.mxu0 %v134
    %159 = vmatprep.subr.bf16.mxu0 0
    %160 = vmatpush1.bf16.msra.mxu0 0
    %161 = vmatprep.subr.bf16.mxu0 0
    %162 = vmatpush1.bf16.msra.mxu0 0
    %163 = vmatprep.subr.bf16.mxu0 0
    %164 = vmatpush1.bf16.msra.mxu0 0
    %165 = vmatprep.subr.bf16.mxu0 0
    %166 = vmatpush1.bf16.msra.mxu0 0
    %167 = vmatprep.subr.bf16.mxu0 0
    %168 = vmatpush1.bf16.msra.mxu0 0
    %169 = vmatprep.subr.bf16.mxu0 0
    %170 = vmatpush1.bf16.msra.mxu0 0
    %171 = vmatprep.subr.bf16.mxu0 0
    %172 = vmatpush1.bf16.msra.mxu0 0
    %173 = vmatprep.subr.bf16.mxu0 0
    %174 = vmatpush1.bf16.msra.mxu0 0
    %175 = vmatprep.mubr.bf16.mxu0 0
    %176 = vmatmul.mubr.bf16.gmra.mrb[0].mxu0 %v72
    %v177 = vpop.f32.mrb[0].mxu0
    %v178 = vadd.f32 %v94, %v177
    %v179 = vpop.f32.mrb[0].mxu0
    %v180 = vpop.f32.mrb[0].mxu0
    %v181 = vadd.f32 %v94, %v180
    %v182 = vpop.f32.mrb[0].mxu0
    %183 = vmatprep.mubr.bf16.mxu0 0
    %184 = vmatmul.mubr.bf16.gmra.mrb[0].mxu0 %v73
    %v185 = vpop.f32.mrb[0].mxu0
    %v186 = vadd.f32 %v94, %v185
    %v187 = vpop.f32.mrb[0].mxu0
    %v188 = vpop.f32.mrb[0].mxu0
    %v189 = vadd.f32 %v94, %v188
    %v190 = vpop.f32.mrb[0].mxu0
    %191 = vmatprep.mubr.bf16.mxu0 0
    %192 = vmatmul.mubr.bf16.gmra.mrb[0].mxu0 %v74
    %v193 = vpop.f32.mrb[0].mxu0
    %v194 = vadd.f32 %v94, %v193
    %v195 = vpop.f32.mrb[0].mxu0
    %v196 = vpop.f32.mrb[0].mxu0
    %v197 = vadd.f32 %v94, %v196
    %v198 = vpop.f32.mrb[0].mxu0
    %199 = vdwg.mxu0
    %200 = vadd.xlane.f32.xlu0 %v178
    %v201 = vpop.xlane.xlu0 %200
    %202 = vadd.xlane.f32.xlu0 %v181
    %v203 = vpop.xlane.xlu0 %202
    %204 = vadd.xlane.f32.xlu0 %v186
    %v205 = vpop.xlane.xlu0 %204
    %206 = vadd.xlane.f32.xlu0 %v189
    %v207 = vpop.xlane.xlu0 %206
    %208 = vadd.xlane.f32.xlu0 %v194
    %v209 = vpop.xlane.xlu0 %208
    %210 = vadd.xlane.f32.xlu0 %v197
    %v211 = vpop.xlane.xlu0 %210
    %v212 = vrcp.pop 128.0
    %v213 = vmul.f32 %v201, %v212
    %v214 = vmul.f32 %v203, %v212
    %v215 = vmul.f32 %v205, %v212
    %v216 = vmul.f32 %v207, %v212
    %v217 = vmul.f32 %v209, %v212
    %v218 = vmul.f32 %v211, %v212
    %v219 = vmul.f32 %v178, %v178
    %v220 = vmul.f32 %v181, %v181
    %v221 = vmul.f32 %v186, %v186
    %v222 = vmul.f32 %v189, %v189
    %v223 = vmul.f32 %v194, %v194
    %v224 = vmul.f32 %v197, %v197
    %225 = vadd.xlane.f32.xlu0 %v219
    %v226 = vpop.xlane.xlu0 %225
    %227 = vadd.xlane.f32.xlu0 %v220
    %v228 = vpop.xlane.xlu0 %227
    %229 = vadd.xlane.f32.xlu0 %v221
    %v230 = vpop.xlane.xlu0 %229
    %231 = vadd.xlane.f32.xlu0 %v222
    %v232 = vpop.xlane.xlu0 %231
    %233 = vadd.xlane.f32.xlu0 %v223
    %v234 = vpop.xlane.xlu0 %233
    %235 = vadd.xlane.f32.xlu0 %v224
    %v236 = vpop.xlane.xlu0 %235
    %v237 = vmul.f32 %v226, %v212
    %v238 = vmul.f32 %v228, %v212
    %v239 = vmul.f32 %v230, %v212
    %v240 = vmul.f32 %v232, %v212
    %v241 = vmul.f32 %v234, %v212
    %v242 = vmul.f32 %v236, %v212
    %v243 = vmul.f32 %v213, %v213
    %v244 = vmul.f32 %v214, %v214
    %v245 = vmul.f32 %v215, %v215
    %v246 = vmul.f32 %v216, %v216
    %v247 = vmul.f32 %v217, %v217
    %v248 = vmul.f32 %v218, %v218
    %v249 = vsub.f32 %v237, %v243
    %v250 = vsub.f32 %v238, %v244
    %v251 = vsub.f32 %v239, %v245
    %v252 = vsub.f32 %v240, %v246
    %v253 = vsub.f32 %v241, %v247
    %v254 = vsub.f32 %v242, %v248
    %v255 = vmax.f32 %v249, 0.0
    %v256 = vmax.f32 %v250, 0.0
    %v257 = vmax.f32 %v251, 0.0
    %v258 = vmax.f32 %v252, 0.0
    %v259 = vmax.f32 %v253, 0.0
    %v260 = vmax.f32 %v254, 0.0
    %v261 = vsub.f32 %v178, %v213
    %v262 = vsub.f32 %v181, %v214
    %v263 = vsub.f32 %v186, %v215
    %v264 = vsub.f32 %v189, %v216
    %v265 = vsub.f32 %v194, %v217
    %v266 = vsub.f32 %v197, %v218
    %v267 = vadd.f32 %v255, 1e-05
    %v268 = vadd.f32 %v256, 1e-05
    %v269 = vadd.f32 %v257, 1e-05
    %v270 = vadd.f32 %v258, 1e-05
    %v271 = vadd.f32 %v259, 1e-05
    %v272 = vadd.f32 %v260, 1e-05
    %v273 = vrsqrt.pop %v267
    %v274 = vrsqrt.pop %v268
    %v275 = vrsqrt.pop %v269
    %v276 = vrsqrt.pop %v270
    %v277 = vrsqrt.pop %v271
    %v278 = vrsqrt.pop %v272
    %v279 = vmul.f32 %v261, %v273
    %v280 = vmul.f32 %v262, %v274
    %v281 = vmul.f32 %v263, %v275
    %v282 = vmul.f32 %v264, %v276
    %v283 = vmul.f32 %v265, %v277
    %v284 = vmul.f32 %v266, %v278
    %v285 = vlaneseq
    %v286 = vshrl.u32 %v285, 7
    %v287 = vsub.s32 0, %v286
    %v288 = vrot.slane %v61, %v287
    %v289 = vmul.f32 %v279, %v288
    %v290 = vmul.f32 %v280, %v288
    %v291 = vmul.f32 %v281, %v288
    %v292 = vmul.f32 %v282, %v288
    %v293 = vmul.f32 %v283, %v288
    %v294 = vmul.f32 %v284, %v288
    %v295 = vlaneseq
    %v296 = vshrl.u32 %v295, 7
    %v297 = vsub.s32 0, %v296
    %v298 = vrot.slane %v62, %v297
    %v299 = vadd.f32 %v289, %v298
    %v300 = vadd.f32 %v290, %v298
    %v301 = vadd.f32 %v291, %v298
    %v302 = vadd.f32 %v292, %v298
    %v303 = vadd.f32 %v293, %v298
    %v304 = vadd.f32 %v294, %v298
    %v305 = vmax.f32 %v299, 0.0
    %v306 = vmax.f32 %v300, 0.0
    %v307 = vmax.f32 %v301, 0.0
    %v308 = vmax.f32 %v302, 0.0
    %v309 = vmax.f32 %v303, 0.0
    %v310 = vmax.f32 %v304, 0.0
    %v311 = vpack.c.bf16 %v306, %v305
    %v312 = vpack.c.bf16 %v308, %v307
    %v313 = vpack.c.bf16 %v310, %v309
    %v314 = vld [vmem:[#allocation7] sm:$0xf]
    %v315 = vld [vmem:[#allocation7 + $0x4] sm:$0xf]
    %v316 = vld [vmem:[#allocation7 + $0x8] sm:$0xf]
    %v317 = vld [vmem:[#allocation7 + $0xc] sm:$0xf]
    %v318 = vld [vmem:[#allocation7 + $0x10] sm:$0xf]
    %v319 = vld [vmem:[#allocation7 + $0x14] sm:$0xf]
    %v320 = vld [vmem:[#allocation7 + $0x18] sm:$0xf]
    %v321 = vld [vmem:[#allocation7 + $0x1c] sm:$0xf]
    %v322 = vld [vmem:[#allocation7 + $0x20] sm:$0xf]
    %v323 = vld [vmem:[#allocation7 + $0x24] sm:$0xf]
    %v324 = vld [vmem:[#allocation7 + $0x28] sm:$0xf]
    %v325 = vld [vmem:[#allocation7 + $0x2c] sm:$0xf]
    %v326 = vld [vmem:[#allocation7 + $0x30] sm:$0xf]
    %v327 = vld [vmem:[#allocation7 + $0x34] sm:$0xf]
    %v328 = vld [vmem:[#allocation7 + $0x38] sm:$0xf]
    %v329 = vld [vmem:[#allocation7 + $0x3c] sm:$0xf]
    %v330 = vlaneseq
    %v331 = vshrl.u32 %v330, 7
    %v332 = vsub.s32 0, %v331
    %v333 = vrot.slane %v63, %v332
    %v350 = vunpack.c.l.b16 %v314
    %v351 = vunpack.c.l.b16 %v315
    %v352 = vunpack.c.l.b16 %v316
    %v353 = vunpack.c.l.b16 %v317
    %v354 = vunpack.c.l.b16 %v318
    %v355 = vunpack.c.l.b16 %v319
    %v356 = vunpack.c.l.b16 %v320
    %v357 = vunpack.c.l.b16 %v321
    %v358 = vunpack.c.l.b16 %v322
    %v359 = vunpack.c.l.b16 %v323
    %v360 = vunpack.c.l.b16 %v324
    %v361 = vunpack.c.l.b16 %v325
    %v362 = vunpack.c.l.b16 %v326
    %v363 = vunpack.c.l.b16 %v327
    %v364 = vunpack.c.l.b16 %v328
    %v365 = vunpack.c.l.b16 %v329
    %v366 = vpack.c.b16 %v351, %v350
    %v367 = vpack.c.b16 %v353, %v352
    %v368 = vpack.c.b16 %v355, %v354
    %v369 = vpack.c.b16 %v357, %v356
    %v370 = vpack.c.b16 %v359, %v358
    %v371 = vpack.c.b16 %v361, %v360
    %v372 = vpack.c.b16 %v363, %v362
    %v373 = vpack.c.b16 %v365, %v364
    %382 = vmatprep.subr.bf16.mxu0 0
    %383 = vmatpush1.bf16.msra.mxu0 %v366
    %384 = vmatprep.subr.bf16.mxu0 0
    %385 = vmatpush1.bf16.msra.mxu0 %v367
    %386 = vmatprep.subr.bf16.mxu0 0
    %387 = vmatpush1.bf16.msra.mxu0 %v368
    %388 = vmatprep.subr.bf16.mxu0 0
    %389 = vmatpush1.bf16.msra.mxu0 %v369
    %390 = vmatprep.subr.bf16.mxu0 0
    %391 = vmatpush1.bf16.msra.mxu0 %v370
    %392 = vmatprep.subr.bf16.mxu0 0
    %393 = vmatpush1.bf16.msra.mxu0 %v371
    %394 = vmatprep.subr.bf16.mxu0 0
    %395 = vmatpush1.bf16.msra.mxu0 %v372
    %396 = vmatprep.subr.bf16.mxu0 0
    %397 = vmatpush1.bf16.msra.mxu0 %v373
    %398 = vmatprep.subr.bf16.mxu0 0
    %399 = vmatpush1.bf16.msra.mxu0 0
    %400 = vmatprep.subr.bf16.mxu0 0
    %401 = vmatpush1.bf16.msra.mxu0 0
    %402 = vmatprep.subr.bf16.mxu0 0
    %403 = vmatpush1.bf16.msra.mxu0 0
    %404 = vmatprep.subr.bf16.mxu0 0
    %405 = vmatpush1.bf16.msra.mxu0 0
    %406 = vmatprep.subr.bf16.mxu0 0
    %407 = vmatpush1.bf16.msra.mxu0 0
    %408 = vmatprep.subr.bf16.mxu0 0
    %409 = vmatpush1.bf16.msra.mxu0 0
    %410 = vmatprep.subr.bf16.mxu0 0
    %411 = vmatpush1.bf16.msra.mxu0 0
    %412 = vmatprep.subr.bf16.mxu0 0
    %413 = vmatpush1.bf16.msra.mxu0 0
    %414 = vmatprep.mubr.bf16.mxu0 0
    %415 = vmatmul.mubr.bf16.gmra.mrb[0].mxu0 %v311
    %v416 = vpop.f32.mrb[0].mxu0
    %v417 = vadd.f32 %v333, %v416
    %v418 = vpop.f32.mrb[0].mxu0
    %v419 = vpop.f32.mrb[0].mxu0
    %v420 = vadd.f32 %v333, %v419
    %v421 = vpop.f32.mrb[0].mxu0
    %422 = vmatprep.mubr.bf16.mxu0 0
    %423 = vmatmul.mubr.bf16.gmra.mrb[0].mxu0 %v312
    %v424 = vpop.f32.mrb[0].mxu0
    %v425 = vadd.f32 %v333, %v424
    %v426 = vpop.f32.mrb[0].mxu0
    %v427 = vpop.f32.mrb[0].mxu0
    %v428 = vadd.f32 %v333, %v427
    %v429 = vpop.f32.mrb[0].mxu0
    %430 = vmatprep.mubr.bf16.mxu0 0
    %431 = vmatmul.mubr.bf16.gmra.mrb[0].mxu0 %v313
    %v432 = vpop.f32.mrb[0].mxu0
    %v433 = vadd.f32 %v333, %v432
    %v434 = vpop.f32.mrb[0].mxu0
    %v435 = vpop.f32.mrb[0].mxu0
    %v436 = vadd.f32 %v333, %v435
    %v437 = vpop.f32.mrb[0].mxu0
    %438 = vdwg.mxu0
    %439 = vadd.xlane.f32.xlu0 %v417
    %v440 = vpop.xlane.xlu0 %439
    %441 = vadd.xlane.f32.xlu0 %v420
    %v442 = vpop.xlane.xlu0 %441
    %443 = vadd.xlane.f32.xlu0 %v425
    %v444 = vpop.xlane.xlu0 %443
    %445 = vadd.xlane.f32.xlu0 %v428
    %v446 = vpop.xlane.xlu0 %445
    %447 = vadd.xlane.f32.xlu0 %v433
    %v448 = vpop.xlane.xlu0 %447
    %449 = vadd.xlane.f32.xlu0 %v436
    %v450 = vpop.xlane.xlu0 %449
    %v451 = vmul.f32 %v440, %v212
    %v452 = vmul.f32 %v442, %v212
    %v453 = vmul.f32 %v444, %v212
    %v454 = vmul.f32 %v446, %v212
    %v455 = vmul.f32 %v448, %v212
    %v456 = vmul.f32 %v450, %v212
    %v457 = vmul.f32 %v417, %v417
    %v458 = vmul.f32 %v420, %v420
    %v459 = vmul.f32 %v425, %v425
    %v460 = vmul.f32 %v428, %v428
    %v461 = vmul.f32 %v433, %v433
    %v462 = vmul.f32 %v436, %v436
    %463 = vadd.xlane.f32.xlu0 %v457
    %v464 = vpop.xlane.xlu0 %463
    %465 = vadd.xlane.f32.xlu0 %v458
    %v466 = vpop.xlane.xlu0 %465
    %467 = vadd.xlane.f32.xlu0 %v459
    %v468 = vpop.xlane.xlu0 %467
    %469 = vadd.xlane.f32.xlu0 %v460
    %v470 = vpop.xlane.xlu0 %469
    %471 = vadd.xlane.f32.xlu0 %v461
    %v472 = vpop.xlane.xlu0 %471
    %473 = vadd.xlane.f32.xlu0 %v462
    %v474 = vpop.xlane.xlu0 %473
    %v475 = vmul.f32 %v464, %v212
    %v476 = vmul.f32 %v466, %v212
    %v477 = vmul.f32 %v468, %v212
    %v478 = vmul.f32 %v470, %v212
    %v479 = vmul.f32 %v472, %v212
    %v480 = vmul.f32 %v474, %v212
    %v481 = vmul.f32 %v451, %v451
    %v482 = vmul.f32 %v452, %v452
    %v483 = vmul.f32 %v453, %v453
    %v484 = vmul.f32 %v454, %v454
    %v485 = vmul.f32 %v455, %v455
    %v486 = vmul.f32 %v456, %v456
    %v487 = vsub.f32 %v475, %v481
    %v488 = vsub.f32 %v476, %v482
    %v489 = vsub.f32 %v477, %v483
    %v490 = vsub.f32 %v478, %v484
    %v491 = vsub.f32 %v479, %v485
    %v492 = vsub.f32 %v480, %v486
    %v493 = vmax.f32 %v487, 0.0
    %v494 = vmax.f32 %v488, 0.0
    %v495 = vmax.f32 %v489, 0.0
    %v496 = vmax.f32 %v490, 0.0
    %v497 = vmax.f32 %v491, 0.0
    %v498 = vmax.f32 %v492, 0.0
    %v499 = vsub.f32 %v417, %v451
    %v500 = vsub.f32 %v420, %v452
    %v501 = vsub.f32 %v425, %v453
    %v502 = vsub.f32 %v428, %v454
    %v503 = vsub.f32 %v433, %v455
    %v504 = vsub.f32 %v436, %v456
    %v505 = vadd.f32 %v493, 1e-05
    %v506 = vadd.f32 %v494, 1e-05
    %v507 = vadd.f32 %v495, 1e-05
    %v508 = vadd.f32 %v496, 1e-05
    %v509 = vadd.f32 %v497, 1e-05
    %v510 = vadd.f32 %v498, 1e-05
    %v511 = vrsqrt.pop %v505
    %v512 = vrsqrt.pop %v506
    %v513 = vrsqrt.pop %v507
    %v514 = vrsqrt.pop %v508
    %v515 = vrsqrt.pop %v509
    %v516 = vrsqrt.pop %v510
    %v517 = vmul.f32 %v499, %v511
    %v518 = vmul.f32 %v500, %v512
    %v519 = vmul.f32 %v501, %v513
    %v520 = vmul.f32 %v502, %v514
    %v521 = vmul.f32 %v503, %v515
    %v522 = vmul.f32 %v504, %v516
    %v523 = vlaneseq
    %v524 = vshrl.u32 %v523, 7
    %v525 = vsub.s32 0, %v524
    %v526 = vrot.slane %v64, %v525
    %v527 = vmul.f32 %v517, %v526
    %v528 = vmul.f32 %v518, %v526
    %v529 = vmul.f32 %v519, %v526
    %v530 = vmul.f32 %v520, %v526
    %v531 = vmul.f32 %v521, %v526
    %v532 = vmul.f32 %v522, %v526
    %v533 = vlaneseq
    %v534 = vshrl.u32 %v533, 7
    %v535 = vsub.s32 0, %v534
    %v536 = vrot.slane %v65, %v535
    %v537 = vadd.f32 %v527, %v536
    %v538 = vadd.f32 %v528, %v536
    %v539 = vadd.f32 %v529, %v536
    %v540 = vadd.f32 %v530, %v536
    %v541 = vadd.f32 %v531, %v536
    %v542 = vadd.f32 %v532, %v536
    %v543 = vadd.f32 %v537, %v66
    %v544 = vadd.f32 %v538, %v67
    %v545 = vadd.f32 %v539, %v68
    %v546 = vadd.f32 %v540, %v69
    %v547 = vadd.f32 %v541, %v70
    %v548 = vadd.f32 %v542, %v71
    %v549 = vmax.f32 %v543, 0.0
    %v550 = vmax.f32 %v544, 0.0
    %v551 = vmax.f32 %v545, 0.0
    %v552 = vmax.f32 %v546, 0.0
    %v553 = vmax.f32 %v547, 0.0
    %v554 = vmax.f32 %v548, 0.0
    %555 = vst [vmem:[#allocation8] sm:$0xff] %v549
    %556 = vst [vmem:[#allocation8 + $0x8] sm:$0xff] %v550
    %557 = vst [vmem:[#allocation8 + $0x10] sm:$0xff] %v551
    %558 = vst [vmem:[#allocation8 + $0x18] sm:$0xff] %v552
    %559 = vst [vmem:[#allocation8 + $0x20] sm:$0xff] %v553
    %560 = vst [vmem:[#allocation8 + $0x28] sm:$0xff] %v554
    // Predicated region
    $region30: #{residual_block.1} parent=1 // pred_check
      _
    $region31: #{residual_block.1} parent=1 // pred_check_branch
      %562 = sbr.rel (0) target = $region33
    $region32: #{residual_block.1} parent=1 // pred_region
      %s564 = ssub.s32 768, 768
      %565 = vsyncadd [#allocation4], %s564
      %s566 = sshll.u32 [#allocation8], 4
      %s567 = int_to_ptr.vmem [resolvable:$true] %s566
      %572 = dma.vmem_to_hbm [thread:$0]  %s567, 768, %s4, [#allocation4], 128, 128, 8
    $region33: #{residual_block.1} parent=1 // pred_fallthru
      _
    // Predicated region
    $region34: #{residual_block.1} parent=1 // pred_check
      _
    $region35: #{residual_block.1} parent=1 // pred_check_branch
      %574 = sbr.rel (0) target = $region37
    $region36: #{residual_block.1} parent=1 // pred_region
      %575 = dma.done [#allocation4], 768
    $region37: #{residual_block.1} parent=1 // pred_fallthru
      _
    %576 = vsyncpa [#allocation3], 1
    %577 = vsyncpa [#allocation6], 1
    %578 = vsyncpa [#allocation4], 1

</llo_original>
